<compile_context>
chip_gen: v6e
topology: v6e:2x2x1
jax: 0.10.0
libtpu: 0.0.40
codegen_flags: <defaults>
</compile_context>

<pallas_src>
import functools

import jax
import jax.numpy as jnp
from jax.experimental import pallas as pl
from jax.experimental.pallas import tpu as pltpu

HIDDEN = 256
TM_CAP = 512  # per-grid-step batch rows


def _round_up(x, m):
    return ((x + m - 1) // m) * m


def _cdiv(a, b):
    return (a + b - 1) // b


def _mlp_kernel(x_ref,
                w1_ref, b1_ref,
                w2_ref, b2_ref,
                w3_ref, b3_ref,
                w4_ref, b4_ref,
                o_ref):
    # x_ref: (TM, obs_dim) f32 tile; weights bf16, biases f32; output bf16.
    # All matmuls use bf16 operands with f32 accumulation on the MXU;
    # activations are re-cast to bf16 between layers.
    x = x_ref[...].astype(jnp.bfloat16)

    h = jnp.dot(x, w1_ref[...], preferred_element_type=jnp.float32) + b1_ref[...]
    h = jnp.maximum(h, 0.0)                                   # ReLU

    h = jnp.dot(h.astype(jnp.bfloat16), w2_ref[...],
                preferred_element_type=jnp.float32) + b2_ref[...]
    h = jnp.maximum(h, 0.0)                                   # ReLU
    # Dropout(p=0.2): identity in eval mode.

    h = jnp.dot(h.astype(jnp.bfloat16), w3_ref[...],
                preferred_element_type=jnp.float32) + b3_ref[...]
    h = jnp.maximum(h, 0.0)                                   # ReLU
    # Dropout(p=0.2): identity in eval mode.

    h = jnp.dot(h.astype(jnp.bfloat16), w4_ref[...],
                preferred_element_type=jnp.float32) + b4_ref[...]
    o_ref[...] = jnp.tanh(h).astype(jnp.bfloat16)             # Tanh, bf16 out


@functools.partial(jax.jit, static_argnames=("act_dim",))
def model_net_forward(x, params, *, act_dim):
    """x: (B, obs_dim) float32.

    params: dict of bf16 weights (in, out_pad) and f32 biases (1, out_pad),
    as produced by prepare_params(). act_dim is static.
    Returns: (B, act_dim) float32.
    """
    B, obs_dim = x.shape
    act_pad = params["w4"].shape[1]

    # Batch tiling: round to bf16 sublane multiple (16); cap per-step rows,
    # and for large B guarantee >=2 grid steps so the "parallel" batch axis
    # can shard across both TensorCores (v7x).
    B_aligned = _round_up(B, 16)
    if B_aligned <= TM_CAP:
        TM = B_aligned
    else:
        TM = min(TM_CAP, _round_up(_cdiv(B_aligned, 2), 256))
    B_pad = _round_up(B_aligned, TM)
    grid = (B_pad // TM,)

    # Only pad batch rows (f32, no cast, usually tiny or a no-op).
    if B_pad != B:
        x = jnp.pad(x, ((0, B_pad - B), (0, 0)))

    def pinned(shape):
        # Weight/bias blocks: full array, same block every grid step -> Pallas
        # keeps them resident in VMEM (no re-DMA across steps).
        return pl.BlockSpec(shape, lambda i: (0,) * len(shape))

    w1, b1 = params["w1"], params["b1"]
    w2, b2 = params["w2"], params["b2"]
    w3, b3 = params["w3"], params["b3"]
    w4, b4 = params["w4"], params["b4"]

    weight_bytes = sum(a.size * a.dtype.itemsize
                       for a in (w1, b1, w2, b2, w3, b3, w4, b4))
    cost = pl.CostEstimate(
        flops=2 * B_pad * (obs_dim * HIDDEN + HIDDEN * HIDDEN
                           + HIDDEN * HIDDEN + HIDDEN * act_pad),
        transcendentals=B_pad * act_pad,
        bytes_accessed=B_pad * obs_dim * 4 + weight_bytes + B_pad * act_pad * 2,
    )

    out = pl.pallas_call(
        _mlp_kernel,
        out_shape=jax.ShapeDtypeStruct((B_pad, act_pad), jnp.bfloat16),
        grid=grid,
        in_specs=[
            pl.BlockSpec((TM, obs_dim), lambda i: (i, 0)),   # x tile (f32)
            pinned(w1.shape), pinned(b1.shape),
            pinned(w2.shape), pinned(b2.shape),
            pinned(w3.shape), pinned(b3.shape),
            pinned(w4.shape), pinned(b4.shape),
        ],
        out_specs=pl.BlockSpec((TM, act_pad), lambda i: (i, 0)),
        compiler_params=pltpu.CompilerParams(
            dimension_semantics=("parallel",)),
        cost_estimate=cost,
    )(x, w1, b1, w2, b2, w3, b3, w4, b4)

    return out[:B, :act_dim].astype(jnp.float32)


def init_params(key, obs_dim, act_dim, hidden=HIDDEN):
    """Deterministic synthetic init (uniform, PyTorch-Linear-like fan_in scaling).

    Returns unpadded float32 params laid out as (in, out) weights, (1, out) biases.
    """
    ks = jax.random.split(key, 8)

    def linear(kw, kb, fan_in, fan_out):
        bound = 1.0 / jnp.sqrt(fan_in)
        w = jax.random.uniform(kw, (fan_in, fan_out), jnp.float32, -bound, bound)
        b = jax.random.uniform(kb, (1, fan_out), jnp.float32, -bound, bound)
        return w, b

    w1, b1 = linear(ks[0], ks[1], obs_dim, hidden)
    w2, b2 = linear(ks[2], ks[3], hidden, hidden)
    w3, b3 = linear(ks[4], ks[5], hidden, hidden)
    w4, b4 = linear(ks[6], ks[7], hidden, act_dim)
    return dict(w1=w1, b1=b1, w2=w2, b2=b2, w3=w3, b3=b3, w4=w4, b4=b4)


def prepare_params(raw, obs_dim, act_dim):
    """Cast weights to bf16; pad act dim to a lane multiple of 128 for a
    lane-dense (unmasked-vst) output slab. The obs dim keeps its true extent
    (full-extent last-dim block) so no input padding/cast pass is needed."""
    act_pad = _round_up(max(act_dim, 128), 128)

    w4 = jnp.zeros((HIDDEN, act_pad), jnp.float32).at[:, :act_dim].set(raw["w4"])
    b4 = jnp.zeros((1, act_pad), jnp.float32).at[:, :act_dim].set(raw["b4"])

    return dict(
        w1=raw["w1"].astype(jnp.bfloat16), b1=raw["b1"],
        w2=raw["w2"].astype(jnp.bfloat16), b2=raw["b2"],
        w3=raw["w3"].astype(jnp.bfloat16), b3=raw["b3"],
        w4=w4.astype(jnp.bfloat16), b4=b4,
    )


def reference_forward(x, raw):
    """Pure-JAX reference mirroring the kernel's bf16-operand / f32-accum math."""
    xb = x.astype(jnp.bfloat16)
    h = jnp.dot(xb, raw["w1"].astype(jnp.bfloat16),
                preferred_element_type=jnp.float32) + raw["b1"]
    h = jnp.maximum(h, 0.0)
    h = jnp.dot(h.astype(jnp.bfloat16), raw["w2"].astype(jnp.bfloat16),
                preferred_element_type=jnp.float32) + raw["b2"]
    h = jnp.maximum(h, 0.0)
    h = jnp.dot(h.astype(jnp.bfloat16), raw["w3"].astype(jnp.bfloat16),
                preferred_element_type=jnp.float32) + raw["b3"]
    h = jnp.maximum(h, 0.0)
    h = jnp.dot(h.astype(jnp.bfloat16), raw["w4"].astype(jnp.bfloat16),
                preferred_element_type=jnp.float32) + raw["b4"]
    return jnp.tanh(h)


if __name__ == "__main__":
    OBS_DIM = 16     # observation_shape
    ACT_DIM = 4      # action_shape
    BATCH = 8

    key = jax.random.PRNGKey(0)
    k_params, k_x = jax.random.split(key)

    raw = init_params(k_params, OBS_DIM, ACT_DIM)
    params = prepare_params(raw, OBS_DIM, ACT_DIM)
    x = jax.random.normal(k_x, (BATCH, OBS_DIM), jnp.float32)

    out = model_net_forward(x, params, act_dim=ACT_DIM)
    out = jax.block_until_ready(out)

    ref = reference_forward(x, raw)

    assert out.shape == (BATCH, ACT_DIM), out.shape
    max_err = float(jnp.max(jnp.abs(out - ref)))
    # Output is bf16 (quantization ~4e-3 on tanh in [-1,1]) plus bf16-matmul error.
    assert jnp.allclose(out, ref, atol=2e-2, rtol=2e-2), max_err

    print("KERNEL_OK")
</pallas_src>

<mosaic_0001>
module attributes {stable_mosaic.version = 11 : i64} {
  func.func @_mlp_kernel(%arg0: i32, %arg1: memref<16x16xf32, #tpu.memory_space<vmem>>, %arg2: memref<16x256xbf16, #tpu.memory_space<vmem>>, %arg3: memref<1x256xf32, #tpu.memory_space<vmem>>, %arg4: memref<256x256xbf16, #tpu.memory_space<vmem>>, %arg5: memref<1x256xf32, #tpu.memory_space<vmem>>, %arg6: memref<256x256xbf16, #tpu.memory_space<vmem>>, %arg7: memref<1x256xf32, #tpu.memory_space<vmem>>, %arg8: memref<256x128xbf16, #tpu.memory_space<vmem>>, %arg9: memref<1x128xf32, #tpu.memory_space<vmem>>, %arg10: memref<16x128xbf16, #tpu.memory_space<vmem>>) attributes {dimension_semantics = [#tpu.dimension_semantics<parallel>], iteration_bounds = array<i64: 1>, scalar_prefetch = 0 : i64, scratch_operands = 0 : i64, tpu.core_type = #tpu.core_type<tc>, window_params = [{transform_indices = @transform_0, window_bounds = array<i64: 16, 16>}, {pipeline_mode = #tpu.pipeline_mode<synchronous>, transform_indices = @transform_1, window_bounds = array<i64: 16, 256>}, {pipeline_mode = #tpu.pipeline_mode<synchronous>, transform_indices = @transform_2, window_bounds = array<i64: 1, 256>}, {pipeline_mode = #tpu.pipeline_mode<synchronous>, transform_indices = @transform_3, window_bounds = array<i64: 256, 256>}, {pipeline_mode = #tpu.pipeline_mode<synchronous>, transform_indices = @transform_4, window_bounds = array<i64: 1, 256>}, {pipeline_mode = #tpu.pipeline_mode<synchronous>, transform_indices = @transform_5, window_bounds = array<i64: 256, 256>}, {pipeline_mode = #tpu.pipeline_mode<synchronous>, transform_indices = @transform_6, window_bounds = array<i64: 1, 256>}, {pipeline_mode = #tpu.pipeline_mode<synchronous>, transform_indices = @transform_7, window_bounds = array<i64: 256, 128>}, {pipeline_mode = #tpu.pipeline_mode<synchronous>, transform_indices = @transform_8, window_bounds = array<i64: 1, 128>}, {transform_indices = @transform_9, window_bounds = array<i64: 16, 128>}]} {
    %c0 = arith.constant 0 : index
    %c0_0 = arith.constant 0 : index
    %0 = vector.load %arg1[%c0, %c0_0] : memref<16x16xf32, #tpu.memory_space<vmem>>, vector<16x16xf32>
    %1 = arith.truncf %0 : vector<16x16xf32> to vector<16x16xbf16>
    %c0_1 = arith.constant 0 : index
    %c0_2 = arith.constant 0 : index
    %2 = vector.load %arg2[%c0_1, %c0_2] : memref<16x256xbf16, #tpu.memory_space<vmem>>, vector<16x256xbf16>
    %cst = arith.constant dense<0.000000e+00> : vector<16x256xf32>
    %3 = tpu.matmul %1, %2, %cst {dimension_numbers = #tpu.dot_dimension_numbers<[1], [0], [0], [1], [0, 0, 1, 1], [], []>} : vector<16x16xbf16>, vector<16x256xbf16>, vector<16x256xf32> -> vector<16x256xf32>
    %c0_3 = arith.constant 0 : index
    %c0_4 = arith.constant 0 : index
    %4 = vector.load %arg3[%c0_3, %c0_4] : memref<1x256xf32, #tpu.memory_space<vmem>>, vector<1x256xf32>
    %5 = vector.broadcast %4 : vector<1x256xf32> to vector<16x256xf32>
    %6 = arith.addf %3, %5 : vector<16x256xf32>
    %cst_5 = arith.constant 0.000000e+00 : f32
    %7 = vector.broadcast %cst_5 : f32 to vector<16x256xf32>
    %8 = arith.maximumf %6, %7 : vector<16x256xf32>
    %9 = arith.truncf %8 : vector<16x256xf32> to vector<16x256xbf16>
    %c0_6 = arith.constant 0 : index
    %c0_7 = arith.constant 0 : index
    %10 = vector.load %arg4[%c0_6, %c0_7] : memref<256x256xbf16, #tpu.memory_space<vmem>>, vector<256x256xbf16>
    %cst_8 = arith.constant dense<0.000000e+00> : vector<16x256xf32>
    %11 = tpu.matmul %9, %10, %cst_8 {dimension_numbers = #tpu.dot_dimension_numbers<[1], [0], [0], [1], [0, 0, 1, 1], [], []>} : vector<16x256xbf16>, vector<256x256xbf16>, vector<16x256xf32> -> vector<16x256xf32>
    %c0_9 = arith.constant 0 : index
    %c0_10 = arith.constant 0 : index
    %12 = vector.load %arg5[%c0_9, %c0_10] : memref<1x256xf32, #tpu.memory_space<vmem>>, vector<1x256xf32>
    %13 = vector.broadcast %12 : vector<1x256xf32> to vector<16x256xf32>
    %14 = arith.addf %11, %13 : vector<16x256xf32>
    %cst_11 = arith.constant 0.000000e+00 : f32
    %15 = vector.broadcast %cst_11 : f32 to vector<16x256xf32>
    %16 = arith.maximumf %14, %15 : vector<16x256xf32>
    %17 = arith.truncf %16 : vector<16x256xf32> to vector<16x256xbf16>
    %c0_12 = arith.constant 0 : index
    %c0_13 = arith.constant 0 : index
    %18 = vector.load %arg6[%c0_12, %c0_13] : memref<256x256xbf16, #tpu.memory_space<vmem>>, vector<256x256xbf16>
    %cst_14 = arith.constant dense<0.000000e+00> : vector<16x256xf32>
    %19 = tpu.matmul %17, %18, %cst_14 {dimension_numbers = #tpu.dot_dimension_numbers<[1], [0], [0], [1], [0, 0, 1, 1], [], []>} : vector<16x256xbf16>, vector<256x256xbf16>, vector<16x256xf32> -> vector<16x256xf32>
    %c0_15 = arith.constant 0 : index
    %c0_16 = arith.constant 0 : index
    %20 = vector.load %arg7[%c0_15, %c0_16] : memref<1x256xf32, #tpu.memory_space<vmem>>, vector<1x256xf32>
    %21 = vector.broadcast %20 : vector<1x256xf32> to vector<16x256xf32>
    %22 = arith.addf %19, %21 : vector<16x256xf32>
    %cst_17 = arith.constant 0.000000e+00 : f32
    %23 = vector.broadcast %cst_17 : f32 to vector<16x256xf32>
    %24 = arith.maximumf %22, %23 : vector<16x256xf32>
    %25 = arith.truncf %24 : vector<16x256xf32> to vector<16x256xbf16>
    %c0_18 = arith.constant 0 : index
    %c0_19 = arith.constant 0 : index
    %26 = vector.load %arg8[%c0_18, %c0_19] : memref<256x128xbf16, #tpu.memory_space<vmem>>, vector<256x128xbf16>
    %cst_20 = arith.constant dense<0.000000e+00> : vector<16x128xf32>
    %27 = tpu.matmul %25, %26, %cst_20 {dimension_numbers = #tpu.dot_dimension_numbers<[1], [0], [0], [1], [0, 0, 1, 1], [], []>} : vector<16x256xbf16>, vector<256x128xbf16>, vector<16x128xf32> -> vector<16x128xf32>
    %c0_21 = arith.constant 0 : index
    %c0_22 = arith.constant 0 : index
    %28 = vector.load %arg9[%c0_21, %c0_22] : memref<1x128xf32, #tpu.memory_space<vmem>>, vector<1x128xf32>
    %29 = vector.broadcast %28 : vector<1x128xf32> to vector<16x128xf32>
    %30 = arith.addf %27, %29 : vector<16x128xf32>
    %31 = math.tanh %30 : vector<16x128xf32>
    %32 = arith.truncf %31 : vector<16x128xf32> to vector<16x128xbf16>
    %c0_23 = arith.constant 0 : index
    %c0_24 = arith.constant 0 : index
    %33 = vector.load %arg10[%c0_23, %c0_24] : memref<16x128xbf16, #tpu.memory_space<vmem>>, vector<16x128xbf16>
    tpu.vector_store %arg10[%c0_23, %c0_24], %32 {strides = array<i32>} : memref<16x128xbf16, #tpu.memory_space<vmem>>, vector<16x128xbf16>,
    return
  }
  func.func @transform_0(%arg0: i32) -> (i32, i32) {
    %c0_i32 = arith.constant 0 : i32
    %c0_i32_0 = arith.constant 0 : i32
    return %arg0, %c0_i32 : i32, i32
  }
  func.func @transform_1(%arg0: i32) -> (i32, i32) {
    %c0_i32 = arith.constant 0 : i32
    %c0_i32_0 = arith.constant 0 : i32
    %c0_i32_1 = arith.constant 0 : i32
    return %c0_i32, %c0_i32_0 : i32, i32
  }
  func.func @transform_2(%arg0: i32) -> (i32, i32) {
    %c0_i32 = arith.constant 0 : i32
    %c0_i32_0 = arith.constant 0 : i32
    %c0_i32_1 = arith.constant 0 : i32
    return %c0_i32, %c0_i32_0 : i32, i32
  }
  func.func @transform_3(%arg0: i32) -> (i32, i32) {
    %c0_i32 = arith.constant 0 : i32
    %c0_i32_0 = arith.constant 0 : i32
    %c0_i32_1 = arith.constant 0 : i32
    return %c0_i32, %c0_i32_0 : i32, i32
  }
  func.func @transform_4(%arg0: i32) -> (i32, i32) {
    %c0_i32 = arith.constant 0 : i32
    %c0_i32_0 = arith.constant 0 : i32
    %c0_i32_1 = arith.constant 0 : i32
    return %c0_i32, %c0_i32_0 : i32, i32
  }
  func.func @transform_5(%arg0: i32) -> (i32, i32) {
    %c0_i32 = arith.constant 0 : i32
    %c0_i32_0 = arith.constant 0 : i32
    %c0_i32_1 = arith.constant 0 : i32
    return %c0_i32, %c0_i32_0 : i32, i32
  }
  func.func @transform_6(%arg0: i32) -> (i32, i32) {
    %c0_i32 = arith.constant 0 : i32
    %c0_i32_0 = arith.constant 0 : i32
    %c0_i32_1 = arith.constant 0 : i32
    return %c0_i32, %c0_i32_0 : i32, i32
  }
  func.func @transform_7(%arg0: i32) -> (i32, i32) {
    %c0_i32 = arith.constant 0 : i32
    %c0_i32_0 = arith.constant 0 : i32
    %c0_i32_1 = arith.constant 0 : i32
    return %c0_i32, %c0_i32_0 : i32, i32
  }
  func.func @transform_8(%arg0: i32) -> (i32, i32) {
    %c0_i32 = arith.constant 0 : i32
    %c0_i32_0 = arith.constant 0 : i32
    %c0_i32_1 = arith.constant 0 : i32
    return %c0_i32, %c0_i32_0 : i32, i32
  }
  func.func @transform_9(%arg0: i32) -> (i32, i32) {
    %c0_i32 = arith.constant 0 : i32
    %c0_i32_0 = arith.constant 0 : i32
    return %arg0, %c0_i32 : i32, i32
  }
}

</mosaic_0001>

<llo_original>
// kernel: model_net_forward.1
$region0: #{model_net_forward.1}
  #allocation0 [shape = 'u32[]', space=smem, size = 0x4, offset = 0x4, fixed_abs, tag = 'smem constant byte address 0x4 - core index']
  #allocation1 [shape = 'u32[144,128]{1,0:T(1,128)}', space=vmem, size = 0x12000, scoped, tag = 'internal scratch']
  %s0 = inlined_call_operand.vmem [shape: f32[16,16], index: 0, kind: input, shape index: {}]
  %s1 = inlined_call_operand.vmem [shape: bf16[16,256], index: 1, kind: input, shape index: {}]
  %s2 = inlined_call_operand.vmem [shape: f32[1,256], index: 2, kind: input, shape index: {}]
  %s3 = inlined_call_operand.hbm [shape: bf16[256,256], index: 3, kind: input, shape index: {}]
  %s4 = inlined_call_operand.vmem [shape: f32[1,256], index: 4, kind: input, shape index: {}]
  %s5 = inlined_call_operand.hbm [shape: bf16[256,256], index: 5, kind: input, shape index: {}]
  %s6 = inlined_call_operand.vmem [shape: f32[1,256], index: 6, kind: input, shape index: {}]
  %s7 = inlined_call_operand.hbm [shape: bf16[256,128], index: 7, kind: input, shape index: {}]
  %s8 = inlined_call_operand.vmem [shape: f32[1,128], index: 8, kind: input, shape index: {}]
  %s9 = inlined_call_operand.vmem [shape: bf16[16,128], index: 9, kind: output, shape index: {}]
  %s10 = sld [smem:[#allocation0]]
  $region58: #{model_net_forward.1} parent=0
    _
  %s12 = ssub.s32 1, %s10
  %s13 = scalar_select 0, %s12, %s10
  $region1: #{model_net_forward.1} parent=0
    #allocation2 [shape = 'u8[131072]{0}', space=vmem, size = 0x20000, scoped, tag = 'input window, operand 3, single buffered']
    #allocation3 [shape = 's32[1]{0}', space=sflag, size = 0x4, scoped, tag = 'scoped memory for model_net_forward.1']
    #allocation4 [shape = 'u8[131072]{0}', space=vmem, size = 0x20000, scoped, tag = 'input window, operand 5, single buffered']
    #allocation5 [shape = 's32[1]{0}', space=sflag, size = 0x4, scoped, tag = 'scoped memory for model_net_forward.1']
    #allocation6 [shape = 'u8[65536]{0}', space=vmem, size = 0x10000, scoped, tag = 'input window, operand 7, single buffered']
    %14 = vsyncpa [#allocation3], 0
    %15 = vsyncpa [#allocation5], 0
    // Predicated region
    $region2: #{model_net_forward.1} parent=1 // pred_check
      _
    $region3: #{model_net_forward.1} parent=1 // pred_check_branch
      %17 = sbr.rel (0) target = $region5
    $region4: #{model_net_forward.1} parent=1 // pred_region
      _
    $region5: #{model_net_forward.1} parent=1 // pred_fallthru
      _
    // Predicated region
    $region6: #{model_net_forward.1} parent=1 // pred_check
      _
    $region7: #{model_net_forward.1} parent=1 // pred_check_branch
      %19 = sbr.rel (0) target = $region9
    $region8: #{model_net_forward.1} parent=1 // pred_region
      _
    $region9: #{model_net_forward.1} parent=1 // pred_fallthru
      _
    // Predicated region
    $region10: #{model_net_forward.1} parent=1 // pred_check
      _
    $region11: #{model_net_forward.1} parent=1 // pred_check_branch
      %21 = sbr.rel (0) target = $region13
    $region12: #{model_net_forward.1} parent=1 // pred_region
      _
    $region13: #{model_net_forward.1} parent=1 // pred_fallthru
      _
    // Predicated region
    $region14: #{model_net_forward.1} parent=1 // pred_check
      _
    $region15: #{model_net_forward.1} parent=1 // pred_check_branch
      %23 = sbr.rel (0) target = $region17
    $region16: #{model_net_forward.1} parent=1 // pred_region
      %s25 = ssub.s32 4096, 4096
      %26 = vsyncadd [#allocation3], %s25
      %s27 = sshll.u32 [#allocation2], 4
      %s28 = int_to_ptr.vmem [resolvable:$true] %s27
      %33 = dma.hbm_to_vmem [thread:$0]  %s3, 4096, %s28, [#allocation3], 128, 128, 8
    $region17: #{model_net_forward.1} parent=1 // pred_fallthru
      _
    // Predicated region
    $region18: #{model_net_forward.1} parent=1 // pred_check
      _
    $region19: #{model_net_forward.1} parent=1 // pred_check_branch
      %35 = sbr.rel (0) target = $region21
    $region20: #{model_net_forward.1} parent=1 // pred_region
      _
    $region21: #{model_net_forward.1} parent=1 // pred_fallthru
      _
    // Predicated region
    $region22: #{model_net_forward.1} parent=1 // pred_check
      _
    $region23: #{model_net_forward.1} parent=1 // pred_check_branch
      %37 = sbr.rel (0) target = $region25
    $region24: #{model_net_forward.1} parent=1 // pred_region
      %s39 = ssub.s32 4096, 4096
      %40 = vsyncadd [#allocation5], %s39
      %s41 = sshll.u32 [#allocation4], 4
      %s42 = int_to_ptr.vmem [resolvable:$true] %s41
      %47 = dma.hbm_to_vmem [thread:$0]  %s5, 4096, %s42, [#allocation5], 128, 128, 8
    $region25: #{model_net_forward.1} parent=1 // pred_fallthru
      _
    // Predicated region
    $region26: #{model_net_forward.1} parent=1 // pred_check
      _
    $region27: #{model_net_forward.1} parent=1 // pred_check_branch
      %49 = sbr.rel (0) target = $region29
    $region28: #{model_net_forward.1} parent=1 // pred_region
      _
    $region29: #{model_net_forward.1} parent=1 // pred_fallthru
      _
    // Predicated region
    $region30: #{model_net_forward.1} parent=1 // pred_check
      _
    $region31: #{model_net_forward.1} parent=1 // pred_check_branch
      %51 = sbr.rel (0) target = $region33
    $region32: #{model_net_forward.1} parent=1 // pred_region
      %s53 = ssub.s32 2048, 2048
      %54 = vsyncadd [#allocation5], %s53
      %s55 = sshll.u32 [#allocation6], 4
      %s56 = int_to_ptr.vmem [resolvable:$true] %s55
      %61 = dma.hbm_to_vmem [thread:$0]  %s7, 2048, %s56, [#allocation5], 64, 64, 4
    $region33: #{model_net_forward.1} parent=1 // pred_fallthru
      _
    // Predicated region
    $region34: #{model_net_forward.1} parent=1 // pred_check
      _
    $region35: #{model_net_forward.1} parent=1 // pred_check_branch
      %63 = sbr.rel (0) target = $region37
    $region36: #{model_net_forward.1} parent=1 // pred_region
      _
    $region37: #{model_net_forward.1} parent=1 // pred_fallthru
      _
    // Predicated region
    $region38: #{model_net_forward.1} parent=1 // pred_check
      _
    $region39: #{model_net_forward.1} parent=1 // pred_check_branch
      %65 = sbr.rel (0) target = $region41
    $region40: #{model_net_forward.1} parent=1 // pred_region
      %66 = dma.done [#allocation3], 4096
    $region41: #{model_net_forward.1} parent=1 // pred_fallthru
      _
    // Predicated region
    $region42: #{model_net_forward.1} parent=1 // pred_check
      _
    $region43: #{model_net_forward.1} parent=1 // pred_check_branch
      %68 = sbr.rel (0) target = $region45
    $region44: #{model_net_forward.1} parent=1 // pred_region
      %69 = dma.done [#allocation5], 4096
    $region45: #{model_net_forward.1} parent=1 // pred_fallthru
      _
    // Predicated region
    $region46: #{model_net_forward.1} parent=1 // pred_check
      _
    $region47: #{model_net_forward.1} parent=1 // pred_check_branch
      %71 = sbr.rel (0) target = $region49
    $region48: #{model_net_forward.1} parent=1 // pred_region
      %72 = dma.done [#allocation5], 2048
    $region49: #{model_net_forward.1} parent=1 // pred_fallthru
      _
    %v74 = vld [vmem:[%s0] sm:$0xff]
    %v75 = vld [vmem:[%s0 + $0x8] sm:$0xff]
    %v76 = vpack.c.bf16 %v75, %v74
    %v77 = vld [vmem:[%s1] sm:$0xff]
    %v78 = vld [vmem:[%s1 + $0x8] sm:$0xff]
    %v79 = vld [vmem:[%s2] sm:$0x3]
    %v81 = vlaneseq
    %v82 = vshrl.u32 %v81, 7
    %v83 = vsub.s32 0, %v82
    %v84 = vrot.slane %v79, %v83
    %v85 = vlaneseq
    %v86 = vshrl.u32 %v85, 7
    %v87 = vsub.s32 1, %v86
    %v88 = vrot.slane %v79, %v87
    %v93 = vunpack.c.l.b16 %v77
    %v94 = vunpack.c.h.b16 %v77
    %v95 = vunpack.c.l.b16 %v78
    %v96 = vunpack.c.h.b16 %v78
    %v97 = vpack.c.b16 %v95, %v93
    %v98 = vpack.c.b16 %v96, %v94
    %vm101 = vcmask 130048
    %v103 = vsel %vm101, %v76, 0
    %105 = vmatprep.subr.bf16.mxu0 0
    %106 = vmatpush1.bf16.msra.mxu0 0
    %107 = vmatprep.subr.bf16.mxu0 0
    %108 = vmatpush1.bf16.msra.mxu0 0
    %109 = vmatprep.subr.bf16.mxu0 0
    %110 = vmatpush1.bf16.msra.mxu0 0
    %111 = vmatprep.subr.bf16.mxu0 0
    %112 = vmatpush1.bf16.msra.mxu0 0
    %113 = vmatprep.subr.bf16.mxu0 0
    %114 = vmatpush1.bf16.msra.mxu0 0
    %115 = vmatprep.subr.bf16.mxu0 0
    %116 = vmatpush1.bf16.msra.mxu0 0
    %117 = vmatprep.subr.bf16.mxu0 0
    %118 = vmatpush1.bf16.msra.mxu0 0
    %119 = vmatprep.subr.bf16.mxu0 %v98
    %120 = vmatpush1.bf16.msra.mxu0 %v97
    %121 = vmatprep.subr.bf16.mxu0 0
    %122 = vmatpush2.bf16.msra.mxu0 0
    %123 = vmatprep.subr.bf16.mxu0 0
    %124 = vmatpush2.bf16.msra.mxu0 0
    %125 = vmatprep.subr.bf16.mxu0 0
    %126 = vmatpush2.bf16.msra.mxu0 0
    %127 = vmatprep.subr.bf16.mxu0 0
    %128 = vmatpush2.bf16.msra.mxu0 0
    %129 = vmatprep.subr.bf16.mxu0 0
    %130 = vmatpush2.bf16.msra.mxu0 0
    %131 = vmatprep.subr.bf16.mxu0 0
    %132 = vmatpush2.bf16.msra.mxu0 0
    %133 = vmatprep.subr.bf16.mxu0 0
    %134 = vmatpush2.bf16.msra.mxu0 0
    %135 = vmatprep.subr.bf16.mxu0 0
    %136 = vmatpush2.bf16.msra.mxu0 0
    %137 = vmatprep.mubr.bf16.mxu0 0
    %138 = vmatmul.mubr.bf16.gmra.mxu0 %v103
    %v139 = vpop.f32.mrf.mxu0
    %v140 = vadd.f32 %v84, %v139
    %v141 = vpop.f32.mrf.mxu0
    %v142 = vadd.f32 %v88, %v141
    %v143 = vpop.f32.mrf.mxu0
    %v144 = vadd.f32 %v84, %v143
    %v145 = vpop.f32.mrf.mxu0
    %v146 = vadd.f32 %v88, %v145
    %147 = vdwg.mxu0
    %v148 = vmax.f32 %v140, 0.0
    %v149 = vmax.f32 %v142, 0.0
    %v150 = vmax.f32 %v144, 0.0
    %v151 = vmax.f32 %v146, 0.0
    %v152 = vpack.c.bf16 %v150, %v148
    %v153 = vpack.c.bf16 %v151, %v149
    %v154 = vld [vmem:[#allocation2] sm:$0xff]
    %v155 = vld [vmem:[#allocation2 + $0x8] sm:$0xff]
    %v156 = vld [vmem:[#allocation2 + $0x10] sm:$0xff]
    %v157 = vld [vmem:[#allocation2 + $0x18] sm:$0xff]
    %v158 = vld [vmem:[#allocation2 + $0x20] sm:$0xff]
    %v159 = vld [vmem:[#allocation2 + $0x28] sm:$0xff]
    %v160 = vld [vmem:[#allocation2 + $0x30] sm:$0xff]
    %v161 = vld [vmem:[#allocation2 + $0x38] sm:$0xff]
    %v162 = vld [vmem:[#allocation2 + $0x40] sm:$0xff]
    %v163 = vld [vmem:[#allocation2 + $0x48] sm:$0xff]
    %v164 = vld [vmem:[#allocation2 + $0x50] sm:$0xff]
    %v165 = vld [vmem:[#allocation2 + $0x58] sm:$0xff]
    %v166 = vld [vmem:[#allocation2 + $0x60] sm:$0xff]
    %v167 = vld [vmem:[#allocation2 + $0x68] sm:$0xff]
    %v168 = vld [vmem:[#allocation2 + $0x70] sm:$0xff]
    %v169 = vld [vmem:[#allocation2 + $0x78] sm:$0xff]
    %v170 = vld [vmem:[#allocation2 + $0x80] sm:$0xff]
    %v171 = vld [vmem:[#allocation2 + $0x88] sm:$0xff]
    %v172 = vld [vmem:[#allocation2 + $0x90] sm:$0xff]
    %v173 = vld [vmem:[#allocation2 + $0x98] sm:$0xff]
    %v174 = vld [vmem:[#allocation2 + $0xa0] sm:$0xff]
    %v175 = vld [vmem:[#allocation2 + $0xa8] sm:$0xff]
    %v176 = vld [vmem:[#allocation2 + $0xb0] sm:$0xff]
    %v177 = vld [vmem:[#allocation2 + $0xb8] sm:$0xff]
    %v178 = vld [vmem:[#allocation2 + $0xc0] sm:$0xff]
    %v179 = vld [vmem:[#allocation2 + $0xc8] sm:$0xff]
    %v180 = vld [vmem:[#allocation2 + $0xd0] sm:$0xff]
    %v181 = vld [vmem:[#allocation2 + $0xd8] sm:$0xff]
    %v182 = vld [vmem:[#allocation2 + $0xe0] sm:$0xff]
    %v183 = vld [vmem:[#allocation2 + $0xe8] sm:$0xff]
    %v184 = vld [vmem:[#allocation2 + $0xf0] sm:$0xff]
    %v185 = vld [vmem:[#allocation2 + $0xf8] sm:$0xff]
    %v186 = vld [vmem:[%s4] sm:$0x3]
    %v188 = vlaneseq
    %v189 = vshrl.u32 %v188, 7
    %v190 = vsub.s32 0, %v189
    %v191 = vrot.slane %v186, %v190
    %v192 = vlaneseq
    %v193 = vshrl.u32 %v192, 7
    %v194 = vsub.s32 1, %v193
    %v195 = vrot.slane %v186, %v194
    %v230 = vunpack.c.l.b16 %v154
    %v231 = vunpack.c.h.b16 %v154
    %v232 = vunpack.c.l.b16 %v155
    %v233 = vunpack.c.h.b16 %v155
    %v234 = vunpack.c.l.b16 %v156
    %v235 = vunpack.c.h.b16 %v156
    %v236 = vunpack.c.l.b16 %v157
    %v237 = vunpack.c.h.b16 %v157
    %v238 = vunpack.c.l.b16 %v158
    %v239 = vunpack.c.h.b16 %v158
    %v240 = vunpack.c.l.b16 %v159
    %v241 = vunpack.c.h.b16 %v159
    %v242 = vunpack.c.l.b16 %v160
    %v243 = vunpack.c.h.b16 %v160
    %v244 = vunpack.c.l.b16 %v161
    %v245 = vunpack.c.h.b16 %v161
    %v246 = vunpack.c.l.b16 %v162
    %v247 = vunpack.c.h.b16 %v162
    %v248 = vunpack.c.l.b16 %v163
    %v249 = vunpack.c.h.b16 %v163
    %v250 = vunpack.c.l.b16 %v164
    %v251 = vunpack.c.h.b16 %v164
    %v252 = vunpack.c.l.b16 %v165
    %v253 = vunpack.c.h.b16 %v165
    %v254 = vunpack.c.l.b16 %v166
    %v255 = vunpack.c.h.b16 %v166
    %v256 = vunpack.c.l.b16 %v167
    %v257 = vunpack.c.h.b16 %v167
    %v258 = vunpack.c.l.b16 %v168
    %v259 = vunpack.c.h.b16 %v168
    %v260 = vunpack.c.l.b16 %v169
    %v261 = vunpack.c.h.b16 %v169
    %v262 = vunpack.c.l.b16 %v170
    %v263 = vunpack.c.h.b16 %v170
    %v264 = vunpack.c.l.b16 %v171
    %v265 = vunpack.c.h.b16 %v171
    %v266 = vunpack.c.l.b16 %v172
    %v267 = vunpack.c.h.b16 %v172
    %v268 = vunpack.c.l.b16 %v173
    %v269 = vunpack.c.h.b16 %v173
    %v270 = vunpack.c.l.b16 %v174
    %v271 = vunpack.c.h.b16 %v174
    %v272 = vunpack.c.l.b16 %v175
    %v273 = vunpack.c.h.b16 %v175
    %v274 = vunpack.c.l.b16 %v176
    %v275 = vunpack.c.h.b16 %v176
    %v276 = vunpack.c.l.b16 %v177
    %v277 = vunpack.c.h.b16 %v177
    %v278 = vunpack.c.l.b16 %v178
    %v279 = vunpack.c.h.b16 %v178
    %v280 = vunpack.c.l.b16 %v179
    %v281 = vunpack.c.h.b16 %v179
    %v282 = vunpack.c.l.b16 %v180
    %v283 = vunpack.c.h.b16 %v180
    %v284 = vunpack.c.l.b16 %v181
    %v285 = vunpack.c.h.b16 %v181
    %v286 = vunpack.c.l.b16 %v182
    %v287 = vunpack.c.h.b16 %v182
    %v288 = vunpack.c.l.b16 %v183
    %v289 = vunpack.c.h.b16 %v183
    %v290 = vunpack.c.l.b16 %v184
    %v291 = vunpack.c.h.b16 %v184
    %v292 = vunpack.c.l.b16 %v185
    %v293 = vunpack.c.h.b16 %v185
    %v294 = vpack.c.b16 %v232, %v230
    %v295 = vpack.c.b16 %v233, %v231
    %v296 = vpack.c.b16 %v236, %v234
    %v297 = vpack.c.b16 %v237, %v235
    %v298 = vpack.c.b16 %v240, %v238
    %v299 = vpack.c.b16 %v241, %v239
    %v300 = vpack.c.b16 %v244, %v242
    %v301 = vpack.c.b16 %v245, %v243
    %v302 = vpack.c.b16 %v248, %v246
    %v303 = vpack.c.b16 %v249, %v247
    %v304 = vpack.c.b16 %v252, %v250
    %v305 = vpack.c.b16 %v253, %v251
    %v306 = vpack.c.b16 %v256, %v254
    %v307 = vpack.c.b16 %v257, %v255
    %v308 = vpack.c.b16 %v260, %v258
    %v309 = vpack.c.b16 %v261, %v259
    %v310 = vpack.c.b16 %v264, %v262
    %v311 = vpack.c.b16 %v265, %v263
    %v312 = vpack.c.b16 %v268, %v266
    %v313 = vpack.c.b16 %v269, %v267
    %v314 = vpack.c.b16 %v272, %v270
    %v315 = vpack.c.b16 %v273, %v271
    %v316 = vpack.c.b16 %v276, %v274
    %v317 = vpack.c.b16 %v277, %v275
    %v318 = vpack.c.b16 %v280, %v278
    %v319 = vpack.c.b16 %v281, %v279
    %v320 = vpack.c.b16 %v284, %v282
    %v321 = vpack.c.b16 %v285, %v283
    %v322 = vpack.c.b16 %v288, %v286
    %v323 = vpack.c.b16 %v289, %v287
    %v324 = vpack.c.b16 %v292, %v290
    %v325 = vpack.c.b16 %v293, %v291
    %358 = vmatprep.subr.bf16.mxu0 %v309
    %359 = vmatpush1.bf16.msra.mxu0 %v308
    %360 = vmatprep.subr.bf16.mxu0 %v307
    %361 = vmatpush1.bf16.msra.mxu0 %v306
    %362 = vmatprep.subr.bf16.mxu0 %v305
    %363 = vmatpush1.bf16.msra.mxu0 %v304
    %364 = vmatprep.subr.bf16.mxu0 %v303
    %365 = vmatpush1.bf16.msra.mxu0 %v302
    %366 = vmatprep.subr.bf16.mxu0 %v301
    %367 = vmatpush1.bf16.msra.mxu0 %v300
    %368 = vmatprep.subr.bf16.mxu0 %v299
    %369 = vmatpush1.bf16.msra.mxu0 %v298
    %370 = vmatprep.subr.bf16.mxu0 %v297
    %371 = vmatpush1.bf16.msra.mxu0 %v296
    %372 = vmatprep.subr.bf16.mxu0 %v295
    %373 = vmatpush1.bf16.msra.mxu0 %v294
    %374 = vmatprep.subr.bf16.mxu0 %v325
    %375 = vmatpush2.bf16.msra.mxu0 %v324
    %376 = vmatprep.subr.bf16.mxu0 %v323
    %377 = vmatpush2.bf16.msra.mxu0 %v322
    %378 = vmatprep.subr.bf16.mxu0 %v321
    %379 = vmatpush2.bf16.msra.mxu0 %v320
    %380 = vmatprep.subr.bf16.mxu0 %v319
    %381 = vmatpush2.bf16.msra.mxu0 %v318
    %382 = vmatprep.subr.bf16.mxu0 %v317
    %383 = vmatpush2.bf16.msra.mxu0 %v316
    %384 = vmatprep.subr.bf16.mxu0 %v315
    %385 = vmatpush2.bf16.msra.mxu0 %v314
    %386 = vmatprep.subr.bf16.mxu0 %v313
    %387 = vmatpush2.bf16.msra.mxu0 %v312
    %388 = vmatprep.subr.bf16.mxu0 %v311
    %389 = vmatpush2.bf16.msra.mxu0 %v310
    %390 = vmatprep.mubr.bf16.mxu0 %v153
    %391 = vmatmul.mubr.bf16.gmra.mxu0 %v152
    %v392 = vpop.f32.mrf.mxu0
    %v393 = vadd.f32 %v191, %v392
    %v394 = vpop.f32.mrf.mxu0
    %v395 = vadd.f32 %v195, %v394
    %v396 = vpop.f32.mrf.mxu0
    %v397 = vadd.f32 %v191, %v396
    %v398 = vpop.f32.mrf.mxu0
    %v399 = vadd.f32 %v195, %v398
    %400 = vdwg.mxu0
    %v401 = vmax.f32 %v393, 0.0
    %v402 = vmax.f32 %v395, 0.0
    %v403 = vmax.f32 %v397, 0.0
    %v404 = vmax.f32 %v399, 0.0
    %v405 = vpack.c.bf16 %v403, %v401
    %v406 = vpack.c.bf16 %v404, %v402
    %v407 = vld [vmem:[#allocation4] sm:$0xff]
    %v408 = vld [vmem:[#allocation4 + $0x8] sm:$0xff]
    %v409 = vld [vmem:[#allocation4 + $0x10] sm:$0xff]
    %v410 = vld [vmem:[#allocation4 + $0x18] sm:$0xff]
    %v411 = vld [vmem:[#allocation4 + $0x20] sm:$0xff]
    %v412 = vld [vmem:[#allocation4 + $0x28] sm:$0xff]
    %v413 = vld [vmem:[#allocation4 + $0x30] sm:$0xff]
    %v414 = vld [vmem:[#allocation4 + $0x38] sm:$0xff]
    %v415 = vld [vmem:[#allocation4 + $0x40] sm:$0xff]
    %v416 = vld [vmem:[#allocation4 + $0x48] sm:$0xff]
    %v417 = vld [vmem:[#allocation4 + $0x50] sm:$0xff]
    %v418 = vld [vmem:[#allocation4 + $0x58] sm:$0xff]
    %v419 = vld [vmem:[#allocation4 + $0x60] sm:$0xff]
    %v420 = vld [vmem:[#allocation4 + $0x68] sm:$0xff]
    %v421 = vld [vmem:[#allocation4 + $0x70] sm:$0xff]
    %v422 = vld [vmem:[#allocation4 + $0x78] sm:$0xff]
    %v423 = vld [vmem:[#allocation4 + $0x80] sm:$0xff]
    %v424 = vld [vmem:[#allocation4 + $0x88] sm:$0xff]
    %v425 = vld [vmem:[#allocation4 + $0x90] sm:$0xff]
    %v426 = vld [vmem:[#allocation4 + $0x98] sm:$0xff]
    %v427 = vld [vmem:[#allocation4 + $0xa0] sm:$0xff]
    %v428 = vld [vmem:[#allocation4 + $0xa8] sm:$0xff]
    %v429 = vld [vmem:[#allocation4 + $0xb0] sm:$0xff]
    %v430 = vld [vmem:[#allocation4 + $0xb8] sm:$0xff]
    %v431 = vld [vmem:[#allocation4 + $0xc0] sm:$0xff]
    %v432 = vld [vmem:[#allocation4 + $0xc8] sm:$0xff]
    %v433 = vld [vmem:[#allocation4 + $0xd0] sm:$0xff]
    %v434 = vld [vmem:[#allocation4 + $0xd8] sm:$0xff]
    %v435 = vld [vmem:[#allocation4 + $0xe0] sm:$0xff]
    %v436 = vld [vmem:[#allocation4 + $0xe8] sm:$0xff]
    %v437 = vld [vmem:[#allocation4 + $0xf0] sm:$0xff]
    %v438 = vld [vmem:[#allocation4 + $0xf8] sm:$0xff]
    %v439 = vld [vmem:[%s6] sm:$0x3]
    %v441 = vlaneseq
    %v442 = vshrl.u32 %v441, 7
    %v443 = vsub.s32 0, %v442
    %v444 = vrot.slane %v439, %v443
    %v445 = vlaneseq
    %v446 = vshrl.u32 %v445, 7
    %v447 = vsub.s32 1, %v446
    %v448 = vrot.slane %v439, %v447
    %v483 = vunpack.c.l.b16 %v407
    %v484 = vunpack.c.h.b16 %v407
    %v485 = vunpack.c.l.b16 %v408
    %v486 = vunpack.c.h.b16 %v408
    %v487 = vunpack.c.l.b16 %v409
    %v488 = vunpack.c.h.b16 %v409
    %v489 = vunpack.c.l.b16 %v410
    %v490 = vunpack.c.h.b16 %v410
    %v491 = vunpack.c.l.b16 %v411
    %v492 = vunpack.c.h.b16 %v411
    %v493 = vunpack.c.l.b16 %v412
    %v494 = vunpack.c.h.b16 %v412
    %v495 = vunpack.c.l.b16 %v413
    %v496 = vunpack.c.h.b16 %v413
    %v497 = vunpack.c.l.b16 %v414
    %v498 = vunpack.c.h.b16 %v414
    %v499 = vunpack.c.l.b16 %v415
    %v500 = vunpack.c.h.b16 %v415
    %v501 = vunpack.c.l.b16 %v416
    %v502 = vunpack.c.h.b16 %v416
    %v503 = vunpack.c.l.b16 %v417
    %v504 = vunpack.c.h.b16 %v417
    %v505 = vunpack.c.l.b16 %v418
    %v506 = vunpack.c.h.b16 %v418
    %v507 = vunpack.c.l.b16 %v419
    %v508 = vunpack.c.h.b16 %v419
    %v509 = vunpack.c.l.b16 %v420
    %v510 = vunpack.c.h.b16 %v420
    %v511 = vunpack.c.l.b16 %v421
    %v512 = vunpack.c.h.b16 %v421
    %v513 = vunpack.c.l.b16 %v422
    %v514 = vunpack.c.h.b16 %v422
    %v515 = vunpack.c.l.b16 %v423
    %v516 = vunpack.c.h.b16 %v423
    %v517 = vunpack.c.l.b16 %v424
    %v518 = vunpack.c.h.b16 %v424
    %v519 = vunpack.c.l.b16 %v425
    %v520 = vunpack.c.h.b16 %v425
    %v521 = vunpack.c.l.b16 %v426
    %v522 = vunpack.c.h.b16 %v426
    %v523 = vunpack.c.l.b16 %v427
    %v524 = vunpack.c.h.b16 %v427
    %v525 = vunpack.c.l.b16 %v428
    %v526 = vunpack.c.h.b16 %v428
    %v527 = vunpack.c.l.b16 %v429
    %v528 = vunpack.c.h.b16 %v429
    %v529 = vunpack.c.l.b16 %v430
    %v530 = vunpack.c.h.b16 %v430
    %v531 = vunpack.c.l.b16 %v431
    %v532 = vunpack.c.h.b16 %v431
    %v533 = vunpack.c.l.b16 %v432
    %v534 = vunpack.c.h.b16 %v432
    %v535 = vunpack.c.l.b16 %v433
    %v536 = vunpack.c.h.b16 %v433
    %v537 = vunpack.c.l.b16 %v434
    %v538 = vunpack.c.h.b16 %v434
    %v539 = vunpack.c.l.b16 %v435
    %v540 = vunpack.c.h.b16 %v435
    %v541 = vunpack.c.l.b16 %v436
    %v542 = vunpack.c.h.b16 %v436
    %v543 = vunpack.c.l.b16 %v437
    %v544 = vunpack.c.h.b16 %v437
    %v545 = vunpack.c.l.b16 %v438
    %v546 = vunpack.c.h.b16 %v438
    %v547 = vpack.c.b16 %v485, %v483
    %v548 = vpack.c.b16 %v486, %v484
    %v549 = vpack.c.b16 %v489, %v487
    %v550 = vpack.c.b16 %v490, %v488
    %v551 = vpack.c.b16 %v493, %v491
    %v552 = vpack.c.b16 %v494, %v492
    %v553 = vpack.c.b16 %v497, %v495
    %v554 = vpack.c.b16 %v498, %v496
    %v555 = vpack.c.b16 %v501, %v499
    %v556 = vpack.c.b16 %v502, %v500
    %v557 = vpack.c.b16 %v505, %v503
    %v558 = vpack.c.b16 %v506, %v504
    %v559 = vpack.c.b16 %v509, %v507
    %v560 = vpack.c.b16 %v510, %v508
    %v561 = vpack.c.b16 %v513, %v511
    %v562 = vpack.c.b16 %v514, %v512
    %v563 = vpack.c.b16 %v517, %v515
    %v564 = vpack.c.b16 %v518, %v516
    %v565 = vpack.c.b16 %v521, %v519
    %v566 = vpack.c.b16 %v522, %v520
    %v567 = vpack.c.b16 %v525, %v523
    %v568 = vpack.c.b16 %v526, %v524
    %v569 = vpack.c.b16 %v529, %v527
    %v570 = vpack.c.b16 %v530, %v528
    %v571 = vpack.c.b16 %v533, %v531
    %v572 = vpack.c.b16 %v534, %v532
    %v573 = vpack.c.b16 %v537, %v535
    %v574 = vpack.c.b16 %v538, %v536
    %v575 = vpack.c.b16 %v541, %v539
    %v576 = vpack.c.b16 %v542, %v540
    %v577 = vpack.c.b16 %v545, %v543
    %v578 = vpack.c.b16 %v546, %v544
    %611 = vmatprep.subr.bf16.mxu0 %v562
    %612 = vmatpush1.bf16.msra.mxu0 %v561
    %613 = vmatprep.subr.bf16.mxu0 %v560
    %614 = vmatpush1.bf16.msra.mxu0 %v559
    %615 = vmatprep.subr.bf16.mxu0 %v558
    %616 = vmatpush1.bf16.msra.mxu0 %v557
    %617 = vmatprep.subr.bf16.mxu0 %v556
    %618 = vmatpush1.bf16.msra.mxu0 %v555
    %619 = vmatprep.subr.bf16.mxu0 %v554
    %620 = vmatpush1.bf16.msra.mxu0 %v553
    %621 = vmatprep.subr.bf16.mxu0 %v552
    %622 = vmatpush1.bf16.msra.mxu0 %v551
    %623 = vmatprep.subr.bf16.mxu0 %v550
    %624 = vmatpush1.bf16.msra.mxu0 %v549
    %625 = vmatprep.subr.bf16.mxu0 %v548
    %626 = vmatpush1.bf16.msra.mxu0 %v547
    %627 = vmatprep.subr.bf16.mxu0 %v578
    %628 = vmatpush2.bf16.msra.mxu0 %v577
    %629 = vmatprep.subr.bf16.mxu0 %v576
    %630 = vmatpush2.bf16.msra.mxu0 %v575
    %631 = vmatprep.subr.bf16.mxu0 %v574
    %632 = vmatpush2.bf16.msra.mxu0 %v573
    %633 = vmatprep.subr.bf16.mxu0 %v572
    %634 = vmatpush2.bf16.msra.mxu0 %v571
    %635 = vmatprep.subr.bf16.mxu0 %v570
    %636 = vmatpush2.bf16.msra.mxu0 %v569
    %637 = vmatprep.subr.bf16.mxu0 %v568
    %638 = vmatpush2.bf16.msra.mxu0 %v567
    %639 = vmatprep.subr.bf16.mxu0 %v566
    %640 = vmatpush2.bf16.msra.mxu0 %v565
    %641 = vmatprep.subr.bf16.mxu0 %v564
    %642 = vmatpush2.bf16.msra.mxu0 %v563
    %643 = vmatprep.mubr.bf16.mxu0 %v406
    %644 = vmatmul.mubr.bf16.gmra.mxu0 %v405
    %v645 = vpop.f32.mrf.mxu0
    %v646 = vadd.f32 %v444, %v645
    %v647 = vpop.f32.mrf.mxu0
    %v648 = vadd.f32 %v448, %v647
    %v649 = vpop.f32.mrf.mxu0
    %v650 = vadd.f32 %v444, %v649
    %v651 = vpop.f32.mrf.mxu0
    %v652 = vadd.f32 %v448, %v651
    %653 = vdwg.mxu0
    %v654 = vmax.f32 %v646, 0.0
    %v655 = vmax.f32 %v648, 0.0
    %v656 = vmax.f32 %v650, 0.0
    %v657 = vmax.f32 %v652, 0.0
    %v658 = vpack.c.bf16 %v656, %v654
    %v659 = vpack.c.bf16 %v657, %v655
    %v660 = vld [vmem:[#allocation6] sm:$0xf]
    %v661 = vld [vmem:[#allocation6 + $0x4] sm:$0xf]
    %v662 = vld [vmem:[#allocation6 + $0x8] sm:$0xf]
    %v663 = vld [vmem:[#allocation6 + $0xc] sm:$0xf]
    %v664 = vld [vmem:[#allocation6 + $0x10] sm:$0xf]
    %v665 = vld [vmem:[#allocation6 + $0x14] sm:$0xf]
    %v666 = vld [vmem:[#allocation6 + $0x18] sm:$0xf]
    %v667 = vld [vmem:[#allocation6 + $0x1c] sm:$0xf]
    %v668 = vld [vmem:[#allocation6 + $0x20] sm:$0xf]
    %v669 = vld [vmem:[#allocation6 + $0x24] sm:$0xf]
    %v670 = vld [vmem:[#allocation6 + $0x28] sm:$0xf]
    %v671 = vld [vmem:[#allocation6 + $0x2c] sm:$0xf]
    %v672 = vld [vmem:[#allocation6 + $0x30] sm:$0xf]
    %v673 = vld [vmem:[#allocation6 + $0x34] sm:$0xf]
    %v674 = vld [vmem:[#allocation6 + $0x38] sm:$0xf]
    %v675 = vld [vmem:[#allocation6 + $0x3c] sm:$0xf]
    %v676 = vld [vmem:[#allocation6 + $0x40] sm:$0xf]
    %v677 = vld [vmem:[#allocation6 + $0x44] sm:$0xf]
    %v678 = vld [vmem:[#allocation6 + $0x48] sm:$0xf]
    %v679 = vld [vmem:[#allocation6 + $0x4c] sm:$0xf]
    %v680 = vld [vmem:[#allocation6 + $0x50] sm:$0xf]
    %v681 = vld [vmem:[#allocation6 + $0x54] sm:$0xf]
    %v682 = vld [vmem:[#allocation6 + $0x58] sm:$0xf]
    %v683 = vld [vmem:[#allocation6 + $0x5c] sm:$0xf]
    %v684 = vld [vmem:[#allocation6 + $0x60] sm:$0xf]
    %v685 = vld [vmem:[#allocation6 + $0x64] sm:$0xf]
    %v686 = vld [vmem:[#allocation6 + $0x68] sm:$0xf]
    %v687 = vld [vmem:[#allocation6 + $0x6c] sm:$0xf]
    %v688 = vld [vmem:[#allocation6 + $0x70] sm:$0xf]
    %v689 = vld [vmem:[#allocation6 + $0x74] sm:$0xf]
    %v690 = vld [vmem:[#allocation6 + $0x78] sm:$0xf]
    %v691 = vld [vmem:[#allocation6 + $0x7c] sm:$0xf]
    %v692 = vld [vmem:[%s8] sm:$0x1]
    %v694 = vlaneseq
    %v695 = vshrl.u32 %v694, 7
    %v696 = vsub.s32 0, %v695
    %v697 = vrot.slane %v692, %v696
    %v731 = vunpack.c.l.b16 %v660
    %v732 = vunpack.c.l.b16 %v661
    %v733 = vunpack.c.l.b16 %v662
    %v734 = vunpack.c.l.b16 %v663
    %v735 = vunpack.c.l.b16 %v664
    %v736 = vunpack.c.l.b16 %v665
    %v737 = vunpack.c.l.b16 %v666
    %v738 = vunpack.c.l.b16 %v667
    %v739 = vunpack.c.l.b16 %v668
    %v740 = vunpack.c.l.b16 %v669
    %v741 = vunpack.c.l.b16 %v670
    %v742 = vunpack.c.l.b16 %v671
    %v743 = vunpack.c.l.b16 %v672
    %v744 = vunpack.c.l.b16 %v673
    %v745 = vunpack.c.l.b16 %v674
    %v746 = vunpack.c.l.b16 %v675
    %v747 = vunpack.c.l.b16 %v676
    %v748 = vunpack.c.l.b16 %v677
    %v749 = vunpack.c.l.b16 %v678
    %v750 = vunpack.c.l.b16 %v679
    %v751 = vunpack.c.l.b16 %v680
    %v752 = vunpack.c.l.b16 %v681
    %v753 = vunpack.c.l.b16 %v682
    %v754 = vunpack.c.l.b16 %v683
    %v755 = vunpack.c.l.b16 %v684
    %v756 = vunpack.c.l.b16 %v685
    %v757 = vunpack.c.l.b16 %v686
    %v758 = vunpack.c.l.b16 %v687
    %v759 = vunpack.c.l.b16 %v688
    %v760 = vunpack.c.l.b16 %v689
    %v761 = vunpack.c.l.b16 %v690
    %v762 = vunpack.c.l.b16 %v691
    %v763 = vpack.c.b16 %v732, %v731
    %v764 = vpack.c.b16 %v734, %v733
    %v765 = vpack.c.b16 %v736, %v735
    %v766 = vpack.c.b16 %v738, %v737
    %v767 = vpack.c.b16 %v740, %v739
    %v768 = vpack.c.b16 %v742, %v741
    %v769 = vpack.c.b16 %v744, %v743
    %v770 = vpack.c.b16 %v746, %v745
    %v771 = vpack.c.b16 %v748, %v747
    %v772 = vpack.c.b16 %v750, %v749
    %v773 = vpack.c.b16 %v752, %v751
    %v774 = vpack.c.b16 %v754, %v753
    %v775 = vpack.c.b16 %v756, %v755
    %v776 = vpack.c.b16 %v758, %v757
    %v777 = vpack.c.b16 %v760, %v759
    %v778 = vpack.c.b16 %v762, %v761
    %795 = vmatprep.subr.bf16.mxu0 0
    %796 = vmatpush1.bf16.msra.mxu0 %v770
    %797 = vmatprep.subr.bf16.mxu0 0
    %798 = vmatpush1.bf16.msra.mxu0 %v769
    %799 = vmatprep.subr.bf16.mxu0 0
    %800 = vmatpush1.bf16.msra.mxu0 %v768
    %801 = vmatprep.subr.bf16.mxu0 0
    %802 = vmatpush1.bf16.msra.mxu0 %v767
    %803 = vmatprep.subr.bf16.mxu0 0
    %804 = vmatpush1.bf16.msra.mxu0 %v766
    %805 = vmatprep.subr.bf16.mxu0 0
    %806 = vmatpush1.bf16.msra.mxu0 %v765
    %807 = vmatprep.subr.bf16.mxu0 0
    %808 = vmatpush1.bf16.msra.mxu0 %v764
    %809 = vmatprep.subr.bf16.mxu0 0
    %810 = vmatpush1.bf16.msra.mxu0 %v763
    %811 = vmatprep.subr.bf16.mxu0 0
    %812 = vmatpush2.bf16.msra.mxu0 %v778
    %813 = vmatprep.subr.bf16.mxu0 0
    %814 = vmatpush2.bf16.msra.mxu0 %v777
    %815 = vmatprep.subr.bf16.mxu0 0
    %816 = vmatpush2.bf16.msra.mxu0 %v776
    %817 = vmatprep.subr.bf16.mxu0 0
    %818 = vmatpush2.bf16.msra.mxu0 %v775
    %819 = vmatprep.subr.bf16.mxu0 0
    %820 = vmatpush2.bf16.msra.mxu0 %v774
    %821 = vmatprep.subr.bf16.mxu0 0
    %822 = vmatpush2.bf16.msra.mxu0 %v773
    %823 = vmatprep.subr.bf16.mxu0 0
    %824 = vmatpush2.bf16.msra.mxu0 %v772
    %825 = vmatprep.subr.bf16.mxu0 0
    %826 = vmatpush2.bf16.msra.mxu0 %v771
    %827 = vmatprep.mubr.bf16.mxu0 %v659
    %828 = vmatmul.mubr.bf16.gmra.mxu0 %v658
    %v829 = vpop.f32.mrf.mxu0
    %v830 = vadd.f32 %v697, %v829
    %v831 = vpop.f32.mrf.mxu0
    %v832 = vpop.f32.mrf.mxu0
    %v833 = vadd.f32 %v697, %v832
    %v834 = vpop.f32.mrf.mxu0
    %835 = vdwg.mxu0
    %v836 = vtanh.pop %v830
    %v837 = vtanh.pop %v833
    %v838 = vpack.c.bf16 %v837, %v836
    %v840 = vunpack.c.l.b16 %v838
    %v841 = vunpack.c.h.b16 %v838
    %v842 = vpack.c.b16 %v840, %v840
    %v843 = vpack.c.b16 %v841, %v841
    %846 = vst [vmem:[%s9] sm:$0xf] %v842
    %847 = vst [vmem:[%s9 + $0x4] sm:$0xf] %v843
    // Predicated region
    $region50: #{model_net_forward.1} parent=1 // pred_check
      _
    $region51: #{model_net_forward.1} parent=1 // pred_check_branch
      %849 = sbr.rel (0) target = $region53
    $region52: #{model_net_forward.1} parent=1 // pred_region
      _
    $region53: #{model_net_forward.1} parent=1 // pred_fallthru
      _
    // Predicated region
    $region54: #{model_net_forward.1} parent=1 // pred_check
      _
    $region55: #{model_net_forward.1} parent=1 // pred_check_branch
      %851 = sbr.rel (0) target = $region57
    $region56: #{model_net_forward.1} parent=1 // pred_region
      _
    $region57: #{model_net_forward.1} parent=1 // pred_fallthru
      _
    %852 = vsyncpa [#allocation3], 1
    %853 = vsyncpa [#allocation5], 1

</llo_original>
